<compile_context>
chip_gen: v6e
topology: v6e:2x2x1
jax: 0.10.0
libtpu: 0.0.40
codegen_flags: <defaults>
</compile_context>

<pallas_src>
import math

import jax
import jax.numpy as jnp
from jax.experimental import pallas as pl
from jax.experimental.pallas import tpu as pltpu


def _round_up(x, m):
    return ((x + m - 1) // m) * m


def _base_tile(n):
    """Large tiles amortize the ~0.35us per-grid-step overhead; N is padded up
    to the chosen tile instead of degrading to 128x128 for awkward sizes."""
    if n >= 1024:
        return 512
    if n >= 256:
        return 256
    return 128


def _vmem_limit_bytes():
    """Generation-specific scoped VMEM limit (~96 MiB on v5e/v6e, ~48 MiB v7x)."""
    cap = 128 * 1024 * 1024
    try:
        info = pltpu.get_tpu_info()
        cap = int(getattr(info, "vmem_capacity_bytes", cap))
    except Exception:
        pass
    return max(32 * 1024 * 1024, min((cap * 3) // 4, 100 * 1024 * 1024))


# ---------------------------------------------------------------------------
# Phase 1: support = x @ W   (flattened-batch GEMM, f32 output)
# ---------------------------------------------------------------------------
def _make_support_kernel(compute_dtype):
    def kernel(x_ref, w_ref, s_ref):
        # x streamed f32, cast in-kernel; w already in compute_dtype (tiny,
        # one-time wrapper cast); f32 accumulation and f32 support output.
        s_ref[...] = jnp.dot(
            x_ref[...].astype(compute_dtype), w_ref[...],
            preferred_element_type=jnp.float32,
        ).astype(s_ref.dtype)
    return kernel


# ---------------------------------------------------------------------------
# Phase 2: out = adj @ support [+ bias], reduction axis last, f32 accumulator
# ---------------------------------------------------------------------------
def _make_aggregate_kernel(tk, resident_support, has_bias, compute_dtype):
    def kernel(adj_ref, s_ref, *rest):
        if has_bias:
            b_ref, o_ref, acc_ref = rest
        else:
            o_ref, acc_ref = rest
        k = pl.program_id(3)

        @pl.when(k == 0)
        def _():
            acc_ref[...] = jnp.zeros_like(acc_ref)

        # In-kernel f32 -> compute_dtype cast: adj is read from HBM exactly
        # once (no wrapper cast pass); the cast is VPU filler under an
        # HBM-bound loop on v6e/v7x.
        # TODO(synk): on v5e (no bf16 VPU) profile this cast; if VALU-bound,
        # pre-cast adj in the wrapper there instead.
        a = adj_ref[...].astype(compute_dtype)
        if resident_support:
            start = pl.multiple_of(k * tk, tk)
            s = s_ref[pl.ds(start, tk), :].astype(compute_dtype)
        else:
            s = s_ref[...].astype(compute_dtype)
        acc_ref[...] += jnp.dot(a, s, preferred_element_type=jnp.float32)

        @pl.when(k == pl.num_programs(3) - 1)
        def _():
            r = acc_ref[...]
            if has_bias:
                r = r + b_ref[0, 0]
            o_ref[...] = r.astype(o_ref.dtype)
    return kernel


def graph_convolution(x, adj, weight, bias=None, *, compute_dtype=jnp.bfloat16):
    """Pallas GCN layer: adj @ (x @ weight) [+ bias].

    x:      (B, N, Fin) float32
    adj:    (B, N, N)   float32
    weight: (Fin, Fout) float32
    bias:   (1, 1, Fout) float32 or None
    compute_dtype: matmul-input dtype (bf16 default; accumulation always f32)
    returns (B, N, Fout) in x.dtype
    """
    B, N, Fin = x.shape
    Fout = weight.shape[1]
    out_dtype = x.dtype
    cbytes = jnp.dtype(compute_dtype).itemsize
    obytes = jnp.dtype(out_dtype).itemsize

    vmem_limit = _vmem_limit_bytes()
    budget = vmem_limit - 6 * 1024 * 1024  # headroom for compiler scratch

    tile_n = _base_tile(N)
    n_pad = _round_up(N, tile_n)
    fin_pad = _round_up(Fin, 128)
    fout_pad = _round_up(Fout, 128)

    # ------------------ Phase 1: support = x @ W (flattened rows) ------------------
    m_rows = B * N
    tm_s = _base_tile(m_rows)
    m_pad = _round_up(m_rows, tm_s)

    # Weight is tiny relative to adj: one-time wrapper cast keeps the resident
    # block at compute_dtype (half the VMEM / HBM of f32).
    w_p = jnp.pad(weight.astype(compute_dtype),
                  ((0, fin_pad - Fin), (0, fout_pad - Fout)))

    # Fout-tile the weight only when the working set would not fit the budget
    # (prevents the 2x-buffered resident weight from blowing v7x's 64 MiB VMEM).
    tn1 = fout_pad

    def est1(tn):
        return (2 * tm_s * fin_pad * 4        # x strip (f32, double-buffered)
                + 2 * fin_pad * tn * cbytes   # weight tile
                + 2 * tm_s * tn * 4)          # f32 support output tile

    while est1(tn1) > budget and tn1 > 128 and (tn1 // 2) % 128 == 0:
        tn1 //= 2

    x_flat = x.reshape(m_rows, Fin)
    x_p = jnp.pad(x_flat, ((0, m_pad - m_rows), (0, fin_pad - Fin)))
    xbytes = jnp.dtype(x_p.dtype).itemsize

    gm1 = m_pad // tm_s
    gn1 = fout_pad // tn1

    support_flat = pl.pallas_call(
        _make_support_kernel(compute_dtype),
        out_shape=jax.ShapeDtypeStruct((m_pad, fout_pad), jnp.float32),
        grid_spec=pltpu.PrefetchScalarGridSpec(
            num_scalar_prefetch=0,
            # Fout-tile axis outermost so each weight tile is fetched once;
            # with gn1 == 1 the weight stays resident for the whole call.
            grid=(gn1, gm1),
            in_specs=[
                pl.BlockSpec((tm_s, fin_pad), lambda j, i: (i, 0)),
                pl.BlockSpec((fin_pad, tn1), lambda j, i: (0, j)),
            ],
            out_specs=pl.BlockSpec((tm_s, tn1), lambda j, i: (i, j)),
        ),
        compiler_params=pltpu.CompilerParams(
            dimension_semantics=("parallel", "parallel"),
            vmem_limit_bytes=vmem_limit,
        ),
        cost_estimate=pl.CostEstimate(
            flops=2 * m_pad * fin_pad * fout_pad,
            transcendentals=0,
            bytes_accessed=(xbytes * gn1 * m_pad * fin_pad
                            + cbytes * fin_pad * fout_pad
                            + 4 * m_pad * fout_pad),
        ),
    )(x_p, w_p)

    # Lay out the f32 support as (B, n_pad, fout_pad) for phase 2 (cheap: the
    # support is small next to adj).
    support = support_flat[:m_rows].reshape(B, N, fout_pad)
    if n_pad != N:
        support = jnp.pad(support, ((0, 0), (0, n_pad - N), (0, 0)))

    # ------------------ Phase 2: out = adj @ support [+ bias] ------------------
    # adj stays in its native f32 in HBM; padding (when needed) keeps f32 too —
    # the compute_dtype cast happens per-tile inside the kernel.
    adj_p = adj
    if n_pad != N:
        adj_p = jnp.pad(adj, ((0, 0), (0, n_pad - N), (0, n_pad - N)))

    b_p = None
    if bias is not None:
        b_p = jnp.pad(bias.astype(jnp.float32),
                      ((0, 0), (0, 0), (0, fout_pad - Fout)))

    tk = tile_n
    tm = tile_n
    tn = fout_pad
    resident = True

    def est2(tm_, tk_, tn_, resident_):
        sup = 2 * n_pad * tn_ * 4 if resident_ else 2 * tk_ * tn_ * 4
        return (2 * tm_ * tk_ * 4          # adj tile (f32 stream, 2 buffers)
                + sup                      # support (f32)
                + 2 * tm_ * tn_ * obytes   # output tile
                + tm_ * tn_ * 4            # f32 accumulator scratch
                + 2 * tn_ * 4)             # bias sliver

    if est2(tm, tk, tn, True) > budget:
        resident = False                                    # fall back to strip
    while est2(tm, tk, tn, resident) > budget and tm > 128:
        tm //= 2                                            # shrink row tile
    while (est2(tm, tk, tn, resident) > budget and tn > 128
           and (tn // 2) % 128 == 0):
        tn //= 2                                            # Fout-tile (v7x, huge Fout)
    while est2(tm, tk, tn, resident) > budget and tk > 128:
        tk //= 2                                            # last resort

    # v7x megacore: make sure the parallel iteration space has >= 2 tiles.
    if B * (n_pad // tm) * (fout_pad // tn) < 2 and tm > 128:
        tm //= 2

    gi = n_pad // tm
    gj = fout_pad // tn
    gk = n_pad // tk

    in_specs = [pl.BlockSpec((None, tm, tk), lambda b, i, j, k: (b, i, k))]
    if resident:
        in_specs.append(
            pl.BlockSpec((None, n_pad, tn), lambda b, i, j, k: (b, 0, j)))
    else:
        in_specs.append(
            pl.BlockSpec((None, tk, tn), lambda b, i, j, k: (b, k, j)))
    args = [adj_p, support]
    if bias is not None:
        in_specs.append(pl.BlockSpec((1, 1, tn), lambda b, i, j, k: (0, 0, j)))
        args.append(b_p)

    sup_bytes = (4 * B * n_pad * fout_pad if resident
                 else 4 * B * gi * n_pad * fout_pad)
    bytes2 = (4 * B * gj * n_pad * n_pad      # adj, re-streamed once per Fout tile
              + sup_bytes
              + obytes * B * n_pad * fout_pad)

    out_p = pl.pallas_call(
        _make_aggregate_kernel(tk, resident, bias is not None, compute_dtype),
        out_shape=jax.ShapeDtypeStruct((B, n_pad, fout_pad), out_dtype),
        grid_spec=pltpu.PrefetchScalarGridSpec(
            num_scalar_prefetch=0,
            grid=(B, gi, gj, gk),              # reduction axis last
            in_specs=in_specs,
            out_specs=pl.BlockSpec((None, tm, tn), lambda b, i, j, k: (b, i, j)),
            scratch_shapes=[pltpu.VMEM((tm, tn), jnp.float32)],
        ),
        compiler_params=pltpu.CompilerParams(
            dimension_semantics=("parallel", "parallel", "parallel", "arbitrary"),
            vmem_limit_bytes=vmem_limit,
        ),
        cost_estimate=pl.CostEstimate(
            flops=2 * B * n_pad * n_pad * fout_pad,
            transcendentals=0,
            bytes_accessed=bytes2,
        ),
    )(*args)

    return out_p[:, :N, :Fout]


def init_gcn_params(key, in_features, out_features, bias=True):
    """Deterministic init matching the module's reset_parameters():
    uniform(-stdv, stdv) with stdv = 1/sqrt(out_features)."""
    stdv = 1.0 / math.sqrt(out_features)
    kw, kb = jax.random.split(key)
    weight = jax.random.uniform(
        kw, (in_features, out_features), jnp.float32, minval=-stdv, maxval=stdv
    )
    b = None
    if bias:
        b = jax.random.uniform(
            kb, (1, 1, out_features), jnp.float32, minval=-stdv, maxval=stdv
        )
    return weight, b


if __name__ == "__main__":
    key = jax.random.PRNGKey(0)
    k_x, k_adj, k_param = jax.random.split(key, 3)

    B, N, Fin, Fout = 2, 16, 32, 32

    x = jax.random.normal(k_x, (B, N, Fin), jnp.float32)
    adj_raw = jax.random.uniform(k_adj, (B, N, N), jnp.float32)
    # Row-normalize to look like a typical GCN adjacency (not required for correctness).
    adj = adj_raw / jnp.sum(adj_raw, axis=-1, keepdims=True)

    weight, bias = init_gcn_params(k_param, Fin, Fout, bias=True)

    # Reference (plain JAX, same semantics as the PyTorch forward).
    ref = jnp.matmul(adj, jnp.matmul(x, weight)) + bias
    ref_nobias = jnp.matmul(adj, jnp.matmul(x, weight))

    # f32 compute path — tight tolerance.
    out_f32 = jax.block_until_ready(
        graph_convolution(x, adj, weight, bias, compute_dtype=jnp.float32)
    )
    assert out_f32.shape == (B, N, Fout)
    assert jnp.allclose(out_f32, ref, atol=1e-4, rtol=1e-4), (
        "f32 path max err", float(jnp.max(jnp.abs(out_f32 - ref)))
    )

    # bf16 fast path (default) — bf16-appropriate tolerance.
    out_bf16 = jax.block_until_ready(graph_convolution(x, adj, weight, bias))
    assert out_bf16.shape == (B, N, Fout)
    assert jnp.allclose(out_bf16, ref, atol=5e-2, rtol=5e-2), (
        "bf16 path max err", float(jnp.max(jnp.abs(out_bf16 - ref)))
    )

    # No-bias variant.
    out_nb = jax.block_until_ready(
        graph_convolution(x, adj, weight, None, compute_dtype=jnp.float32)
    )
    assert jnp.allclose(out_nb, ref_nobias, atol=1e-4, rtol=1e-4)

    print("KERNEL_OK")
</pallas_src>

<mosaic_0001>
module attributes {stable_mosaic.version = 11 : i64} {
  func.func @kernel(%arg0: i32, %arg1: i32, %arg2: memref<128x128xf32, #tpu.memory_space<vmem>>, %arg3: memref<128x128xf32, #tpu.memory_space<vmem>>, %arg4: memref<128x128xf32, #tpu.memory_space<vmem>>) attributes {dimension_semantics = [#tpu.dimension_semantics<parallel>, #tpu.dimension_semantics<parallel>], iteration_bounds = array<i64: 1, 1>, scalar_prefetch = 0 : i64, scratch_operands = 0 : i64, tpu.core_type = #tpu.core_type<tc>, window_params = [{transform_indices = @transform_0, window_bounds = array<i64: 128, 128>}, {transform_indices = @transform_1, window_bounds = array<i64: 128, 128>}, {transform_indices = @transform_2, window_bounds = array<i64: 128, 128>}]} {
    %c0 = arith.constant 0 : index
    %c0_0 = arith.constant 0 : index
    %0 = vector.load %arg2[%c0, %c0_0] : memref<128x128xf32, #tpu.memory_space<vmem>>, vector<128x128xf32>
    %c0_1 = arith.constant 0 : index
    %c0_2 = arith.constant 0 : index
    %1 = vector.load %arg3[%c0_1, %c0_2] : memref<128x128xf32, #tpu.memory_space<vmem>>, vector<128x128xf32>
    %cst = arith.constant dense<0.000000e+00> : vector<128x128xf32>
    %2 = tpu.matmul %0, %1, %cst {dimension_numbers = #tpu.dot_dimension_numbers<[1], [0], [0], [1], [0, 0, 1, 1], [], []>} : vector<128x128xf32>, vector<128x128xf32>, vector<128x128xf32> -> vector<128x128xf32>
    %c0_3 = arith.constant 0 : index
    %c0_4 = arith.constant 0 : index
    %3 = vector.load %arg4[%c0_3, %c0_4] : memref<128x128xf32, #tpu.memory_space<vmem>>, vector<128x128xf32>
    tpu.vector_store %arg4[%c0_3, %c0_4], %2 {strides = array<i32>} : memref<128x128xf32, #tpu.memory_space<vmem>>, vector<128x128xf32>,
    return
  }
  func.func @transform_0(%arg0: i32, %arg1: i32) -> (i32, i32) {
    %c0_i32 = arith.constant 0 : i32
    %c0_i32_0 = arith.constant 0 : i32
    return %arg1, %c0_i32 : i32, i32
  }
  func.func @transform_1(%arg0: i32, %arg1: i32) -> (i32, i32) {
    %c0_i32 = arith.constant 0 : i32
    %c0_i32_0 = arith.constant 0 : i32
    return %c0_i32, %arg0 : i32, i32
  }
  func.func @transform_2(%arg0: i32, %arg1: i32) -> (i32, i32) {
    %c0_i32 = arith.constant 0 : i32
    return %arg1, %arg0 : i32, i32
  }
}

</mosaic_0001>

<llo_original>
// kernel: tpu_custom_call.1
$region0: #{tpu_custom_call.1}
  #allocation0 [shape = 'u32[]', space=smem, size = 0x4, offset = 0x4, fixed_abs, tag = 'smem constant byte address 0x4 - core index']
  #allocation1 [shape = 'u32[144,128]{1,0:T(1,128)}', space=vmem, size = 0x12000, scoped, tag = 'internal scratch']
  %s0 = inlined_call_operand.hbm [shape: f32[128,128], index: 0, kind: input, shape index: {}]
  %s1 = inlined_call_operand.hbm [shape: f32[128,128], index: 1, kind: input, shape index: {}]
  %s2 = inlined_call_operand.hbm [shape: f32[128,128], index: 2, kind: output, shape index: {}]
  %s3 = sld [smem:[#allocation0]]
  $region26: #{tpu_custom_call.1} parent=0
    _
  %s5 = ssub.s32 1, %s3
  %s6 = scalar_select 0, %s5, %s3
  $region1: #{tpu_custom_call.1} parent=0
    #allocation2 [shape = 'u8[65536]{0}', space=vmem, size = 0x10000, scoped, tag = 'input window, operand 0, single buffered']
    #allocation3 [shape = 's32[1]{0}', space=sflag, size = 0x4, scoped, tag = 'scoped memory for tpu_custom_call.1']
    #allocation4 [shape = 's32[1]{0}', space=sflag, size = 0x4, scoped, tag = 'scoped memory for tpu_custom_call.1']
    #allocation5 [shape = 'u8[65536]{0}', space=vmem, size = 0x10000, scoped, tag = 'input window, operand 1, single buffered']
    #allocation6 [shape = 's32[1]{0}', space=sflag, size = 0x4, scoped, tag = 'scoped memory for tpu_custom_call.1']
    #allocation7 [shape = 'u8[65536]{0}', space=vmem, size = 0x10000, scoped, tag = 'output window, operand 0, single buffered']
    %7 = vsyncpa [#allocation3], 0
    %8 = vsyncpa [#allocation6], 0
    %9 = vsyncpa [#allocation4], 0
    // Predicated region
    $region2: #{tpu_custom_call.1} parent=1 // pred_check
      _
    $region3: #{tpu_custom_call.1} parent=1 // pred_check_branch
      %11 = sbr.rel (0) target = $region5
    $region4: #{tpu_custom_call.1} parent=1 // pred_region
      %s13 = ssub.s32 2048, 2048
      %14 = vsyncadd [#allocation3], %s13
      %s15 = sshll.u32 [#allocation2], 4
      %s16 = int_to_ptr.vmem [resolvable:$true] %s15
      %21 = dma.hbm_to_vmem [thread:$0]  %s0, 2048, %s16, [#allocation3], 128, 128, 8
    $region5: #{tpu_custom_call.1} parent=1 // pred_fallthru
      _
    // Predicated region
    $region6: #{tpu_custom_call.1} parent=1 // pred_check
      _
    $region7: #{tpu_custom_call.1} parent=1 // pred_check_branch
      %23 = sbr.rel (0) target = $region9
    $region8: #{tpu_custom_call.1} parent=1 // pred_region
      %s25 = ssub.s32 2048, 2048
      %26 = vsyncadd [#allocation6], %s25
      %s27 = sshll.u32 [#allocation5], 4
      %s28 = int_to_ptr.vmem [resolvable:$true] %s27
      %33 = dma.hbm_to_vmem [thread:$0]  %s1, 2048, %s28, [#allocation6], 128, 128, 8
    $region9: #{tpu_custom_call.1} parent=1 // pred_fallthru
      _
    // Predicated region
    $region10: #{tpu_custom_call.1} parent=1 // pred_check
      _
    $region11: #{tpu_custom_call.1} parent=1 // pred_check_branch
      %35 = sbr.rel (0) target = $region13
    $region12: #{tpu_custom_call.1} parent=1 // pred_region
      %36 = dma.done [#allocation3], 2048
    $region13: #{tpu_custom_call.1} parent=1 // pred_fallthru
      _
    // Predicated region
    $region14: #{tpu_custom_call.1} parent=1 // pred_check
      _
    $region15: #{tpu_custom_call.1} parent=1 // pred_check_branch
      %38 = sbr.rel (0) target = $region17
    $region16: #{tpu_custom_call.1} parent=1 // pred_region
      %39 = dma.done [#allocation6], 2048
    $region17: #{tpu_custom_call.1} parent=1 // pred_fallthru
      _
    %v40 = vld [vmem:[#allocation2] sm:$0xff]
    %v41 = vld [vmem:[#allocation2 + $0x8] sm:$0xff]
    %v42 = vld [vmem:[#allocation2 + $0x10] sm:$0xff]
    %v43 = vld [vmem:[#allocation2 + $0x18] sm:$0xff]
    %v44 = vld [vmem:[#allocation2 + $0x20] sm:$0xff]
    %v45 = vld [vmem:[#allocation2 + $0x28] sm:$0xff]
    %v46 = vld [vmem:[#allocation2 + $0x30] sm:$0xff]
    %v47 = vld [vmem:[#allocation2 + $0x38] sm:$0xff]
    %v48 = vld [vmem:[#allocation2 + $0x40] sm:$0xff]
    %v49 = vld [vmem:[#allocation2 + $0x48] sm:$0xff]
    %v50 = vld [vmem:[#allocation2 + $0x50] sm:$0xff]
    %v51 = vld [vmem:[#allocation2 + $0x58] sm:$0xff]
    %v52 = vld [vmem:[#allocation2 + $0x60] sm:$0xff]
    %v53 = vld [vmem:[#allocation2 + $0x68] sm:$0xff]
    %v54 = vld [vmem:[#allocation2 + $0x70] sm:$0xff]
    %v55 = vld [vmem:[#allocation2 + $0x78] sm:$0xff]
    %v56 = vld [vmem:[#allocation5] sm:$0xff]
    %v57 = vld [vmem:[#allocation5 + $0x8] sm:$0xff]
    %v58 = vld [vmem:[#allocation5 + $0x10] sm:$0xff]
    %v59 = vld [vmem:[#allocation5 + $0x18] sm:$0xff]
    %v60 = vld [vmem:[#allocation5 + $0x20] sm:$0xff]
    %v61 = vld [vmem:[#allocation5 + $0x28] sm:$0xff]
    %v62 = vld [vmem:[#allocation5 + $0x30] sm:$0xff]
    %v63 = vld [vmem:[#allocation5 + $0x38] sm:$0xff]
    %v64 = vld [vmem:[#allocation5 + $0x40] sm:$0xff]
    %v65 = vld [vmem:[#allocation5 + $0x48] sm:$0xff]
    %v66 = vld [vmem:[#allocation5 + $0x50] sm:$0xff]
    %v67 = vld [vmem:[#allocation5 + $0x58] sm:$0xff]
    %v68 = vld [vmem:[#allocation5 + $0x60] sm:$0xff]
    %v69 = vld [vmem:[#allocation5 + $0x68] sm:$0xff]
    %v70 = vld [vmem:[#allocation5 + $0x70] sm:$0xff]
    %v71 = vld [vmem:[#allocation5 + $0x78] sm:$0xff]
    %72 = vmatprep.subr.mxu0 0.0
    %73 = vmatpush1.msra.mxu0 %v71
    %74 = vmatprep.subr.mxu0 0.0
    %75 = vmatpush1.msra.mxu0 %v70
    %76 = vmatprep.subr.mxu0 0.0
    %77 = vmatpush1.msra.mxu0 %v69
    %78 = vmatprep.subr.mxu0 0.0
    %79 = vmatpush1.msra.mxu0 %v68
    %80 = vmatprep.subr.mxu0 0.0
    %81 = vmatpush1.msra.mxu0 %v67
    %82 = vmatprep.subr.mxu0 0.0
    %83 = vmatpush1.msra.mxu0 %v66
    %84 = vmatprep.subr.mxu0 0.0
    %85 = vmatpush1.msra.mxu0 %v65
    %86 = vmatprep.subr.mxu0 0.0
    %87 = vmatpush1.msra.mxu0 %v64
    %88 = vmatprep.subr.mxu0 0.0
    %89 = vmatpush1.msra.mxu0 %v63
    %90 = vmatprep.subr.mxu0 0.0
    %91 = vmatpush1.msra.mxu0 %v62
    %92 = vmatprep.subr.mxu0 0.0
    %93 = vmatpush1.msra.mxu0 %v61
    %94 = vmatprep.subr.mxu0 0.0
    %95 = vmatpush1.msra.mxu0 %v60
    %96 = vmatprep.subr.mxu0 0.0
    %97 = vmatpush1.msra.mxu0 %v59
    %98 = vmatprep.subr.mxu0 0.0
    %99 = vmatpush1.msra.mxu0 %v58
    %100 = vmatprep.subr.mxu0 0.0
    %101 = vmatpush1.msra.mxu0 %v57
    %102 = vmatprep.subr.mxu0 0.0
    %103 = vmatpush1.msra.mxu0 %v56
    %104 = vmatprep.subr.mxu0 0.0
    %105 = vmatpush2.msra.mxu0 0.0
    %106 = vmatprep.subr.mxu0 0.0
    %107 = vmatpush2.msra.mxu0 0.0
    %108 = vmatprep.subr.mxu0 0.0
    %109 = vmatpush2.msra.mxu0 0.0
    %110 = vmatprep.subr.mxu0 0.0
    %111 = vmatpush2.msra.mxu0 0.0
    %112 = vmatprep.subr.mxu0 0.0
    %113 = vmatpush2.msra.mxu0 0.0
    %114 = vmatprep.subr.mxu0 0.0
    %115 = vmatpush2.msra.mxu0 0.0
    %116 = vmatprep.subr.mxu0 0.0
    %117 = vmatpush2.msra.mxu0 0.0
    %118 = vmatprep.subr.mxu0 0.0
    %119 = vmatpush2.msra.mxu0 0.0
    %120 = vmatprep.subr.mxu0 0.0
    %121 = vmatpush2.msra.mxu0 0.0
    %122 = vmatprep.subr.mxu0 0.0
    %123 = vmatpush2.msra.mxu0 0.0
    %124 = vmatprep.subr.mxu0 0.0
    %125 = vmatpush2.msra.mxu0 0.0
    %126 = vmatprep.subr.mxu0 0.0
    %127 = vmatpush2.msra.mxu0 0.0
    %128 = vmatprep.subr.mxu0 0.0
    %129 = vmatpush2.msra.mxu0 0.0
    %130 = vmatprep.subr.mxu0 0.0
    %131 = vmatpush2.msra.mxu0 0.0
    %132 = vmatprep.subr.mxu0 0.0
    %133 = vmatpush2.msra.mxu0 0.0
    %134 = vmatprep.subr.mxu0 0.0
    %135 = vmatpush2.msra.mxu0 0.0
    %136 = vmatprep.mubr.f32.mxu0 0.0
    %137 = vmatmul.mubr.f32.gmra.mxu0 %v40
    %v138 = vpop.f32.mrf.mxu0
    %v139 = vadd.f32 0.0, %v138
    %v140 = vpop.f32.mrf.mxu0
    %141 = vmatprep.mubr.f32.mxu0 0.0
    %142 = vmatmul.mubr.f32.gmra.mxu0 %v41
    %v143 = vpop.f32.mrf.mxu0
    %v144 = vadd.f32 0.0, %v143
    %v145 = vpop.f32.mrf.mxu0
    %146 = vmatprep.mubr.f32.mxu0 0.0
    %147 = vmatmul.mubr.f32.gmra.mxu0 %v42
    %v148 = vpop.f32.mrf.mxu0
    %v149 = vadd.f32 0.0, %v148
    %v150 = vpop.f32.mrf.mxu0
    %151 = vmatprep.mubr.f32.mxu0 0.0
    %152 = vmatmul.mubr.f32.gmra.mxu0 %v43
    %v153 = vpop.f32.mrf.mxu0
    %v154 = vadd.f32 0.0, %v153
    %v155 = vpop.f32.mrf.mxu0
    %156 = vmatprep.mubr.f32.mxu0 0.0
    %157 = vmatmul.mubr.f32.gmra.mxu0 %v44
    %v158 = vpop.f32.mrf.mxu0
    %v159 = vadd.f32 0.0, %v158
    %v160 = vpop.f32.mrf.mxu0
    %161 = vmatprep.mubr.f32.mxu0 0.0
    %162 = vmatmul.mubr.f32.gmra.mxu0 %v45
    %v163 = vpop.f32.mrf.mxu0
    %v164 = vadd.f32 0.0, %v163
    %v165 = vpop.f32.mrf.mxu0
    %166 = vmatprep.mubr.f32.mxu0 0.0
    %167 = vmatmul.mubr.f32.gmra.mxu0 %v46
    %v168 = vpop.f32.mrf.mxu0
    %v169 = vadd.f32 0.0, %v168
    %v170 = vpop.f32.mrf.mxu0
    %171 = vmatprep.mubr.f32.mxu0 0.0
    %172 = vmatmul.mubr.f32.gmra.mxu0 %v47
    %v173 = vpop.f32.mrf.mxu0
    %v174 = vadd.f32 0.0, %v173
    %v175 = vpop.f32.mrf.mxu0
    %176 = vmatprep.mubr.f32.mxu0 0.0
    %177 = vmatmul.mubr.f32.gmra.mxu0 %v48
    %v178 = vpop.f32.mrf.mxu0
    %v179 = vadd.f32 0.0, %v178
    %v180 = vpop.f32.mrf.mxu0
    %181 = vmatprep.mubr.f32.mxu0 0.0
    %182 = vmatmul.mubr.f32.gmra.mxu0 %v49
    %v183 = vpop.f32.mrf.mxu0
    %v184 = vadd.f32 0.0, %v183
    %v185 = vpop.f32.mrf.mxu0
    %186 = vmatprep.mubr.f32.mxu0 0.0
    %187 = vmatmul.mubr.f32.gmra.mxu0 %v50
    %v188 = vpop.f32.mrf.mxu0
    %v189 = vadd.f32 0.0, %v188
    %v190 = vpop.f32.mrf.mxu0
    %191 = vmatprep.mubr.f32.mxu0 0.0
    %192 = vmatmul.mubr.f32.gmra.mxu0 %v51
    %v193 = vpop.f32.mrf.mxu0
    %v194 = vadd.f32 0.0, %v193
    %v195 = vpop.f32.mrf.mxu0
    %196 = vmatprep.mubr.f32.mxu0 0.0
    %197 = vmatmul.mubr.f32.gmra.mxu0 %v52
    %v198 = vpop.f32.mrf.mxu0
    %v199 = vadd.f32 0.0, %v198
    %v200 = vpop.f32.mrf.mxu0
    %201 = vmatprep.mubr.f32.mxu0 0.0
    %202 = vmatmul.mubr.f32.gmra.mxu0 %v53
    %v203 = vpop.f32.mrf.mxu0
    %v204 = vadd.f32 0.0, %v203
    %v205 = vpop.f32.mrf.mxu0
    %206 = vmatprep.mubr.f32.mxu0 0.0
    %207 = vmatmul.mubr.f32.gmra.mxu0 %v54
    %v208 = vpop.f32.mrf.mxu0
    %v209 = vadd.f32 0.0, %v208
    %v210 = vpop.f32.mrf.mxu0
    %211 = vmatprep.mubr.f32.mxu0 0.0
    %212 = vmatmul.mubr.f32.gmra.mxu0 %v55
    %v213 = vpop.f32.mrf.mxu0
    %v214 = vadd.f32 0.0, %v213
    %v215 = vpop.f32.mrf.mxu0
    %216 = vdwg.mxu0
    %217 = vst [vmem:[#allocation7] sm:$0xff] %v139
    %218 = vst [vmem:[#allocation7 + $0x8] sm:$0xff] %v144
    %219 = vst [vmem:[#allocation7 + $0x10] sm:$0xff] %v149
    %220 = vst [vmem:[#allocation7 + $0x18] sm:$0xff] %v154
    %221 = vst [vmem:[#allocation7 + $0x20] sm:$0xff] %v159
    %222 = vst [vmem:[#allocation7 + $0x28] sm:$0xff] %v164
    %223 = vst [vmem:[#allocation7 + $0x30] sm:$0xff] %v169
    %224 = vst [vmem:[#allocation7 + $0x38] sm:$0xff] %v174
    %225 = vst [vmem:[#allocation7 + $0x40] sm:$0xff] %v179
    %226 = vst [vmem:[#allocation7 + $0x48] sm:$0xff] %v184
    %227 = vst [vmem:[#allocation7 + $0x50] sm:$0xff] %v189
    %228 = vst [vmem:[#allocation7 + $0x58] sm:$0xff] %v194
    %229 = vst [vmem:[#allocation7 + $0x60] sm:$0xff] %v199
    %230 = vst [vmem:[#allocation7 + $0x68] sm:$0xff] %v204
    %231 = vst [vmem:[#allocation7 + $0x70] sm:$0xff] %v209
    %232 = vst [vmem:[#allocation7 + $0x78] sm:$0xff] %v214
    // Predicated region
    $region18: #{tpu_custom_call.1} parent=1 // pred_check
      _
    $region19: #{tpu_custom_call.1} parent=1 // pred_check_branch
      %234 = sbr.rel (0) target = $region21
    $region20: #{tpu_custom_call.1} parent=1 // pred_region
      %s236 = ssub.s32 2048, 2048
      %237 = vsyncadd [#allocation4], %s236
      %s238 = sshll.u32 [#allocation7], 4
      %s239 = int_to_ptr.vmem [resolvable:$true] %s238
      %244 = dma.vmem_to_hbm [thread:$0]  %s239, 2048, %s2, [#allocation4], 128, 128, 8
    $region21: #{tpu_custom_call.1} parent=1 // pred_fallthru
      _
    // Predicated region
    $region22: #{tpu_custom_call.1} parent=1 // pred_check
      _
    $region23: #{tpu_custom_call.1} parent=1 // pred_check_branch
      %246 = sbr.rel (0) target = $region25
    $region24: #{tpu_custom_call.1} parent=1 // pred_region
      %247 = dma.done [#allocation4], 2048
    $region25: #{tpu_custom_call.1} parent=1 // pred_fallthru
      _
    %248 = vsyncpa [#allocation3], 1
    %249 = vsyncpa [#allocation6], 1
    %250 = vsyncpa [#allocation4], 1

</llo_original>
